<compile_context>
chip_gen: v7x
topology: tpu7x:2x2x1
jax: 0.10.0
libtpu: 0.0.40
codegen_flags: <defaults>
</compile_context>

<pallas_src>
import jax
import jax.numpy as jnp
from jax.experimental import pallas as pl
from jax.experimental.pallas import tpu as pltpu


def _hswish(v):
    # v * relu6(v + 3) / 6
    return v * (jnp.clip(v + 3.0, 0.0, 6.0) * (1.0 / 6.0))


def _sigmoid(v):
    # written out explicitly (exp + div) to keep the lowering trivial
    return 1.0 / (1.0 + jnp.exp(-v))


def _coordatt_kernel(x_ref, w1_ref, b1_ref, w2_ref, b2_ref, w3_ref, b3_ref,
                     ph_ref, pw_ref, eh_ref, ew_ref, o_ref):
    """One batch element per grid step. x_ref block is (1, C, H*W)."""
    x = x_ref[0].astype(jnp.float32)                                        # (C, HW)

    # --- coordinate pooling (adaptive avg-pool over W and over H) as matmuls
    pooled_h = jnp.dot(x, ph_ref[...], preferred_element_type=jnp.float32)  # (C, H)
    pooled_w = jnp.dot(x, pw_ref[...], preferred_element_type=jnp.float32)  # (C, W)

    # --- 1x1 conv1 with eval-mode BatchNorm folded in ---
    b1 = b1_ref[...]                                                        # (mip, 1)
    y_h = jnp.dot(w1_ref[...], pooled_h, preferred_element_type=jnp.float32) + b1
    y_w = jnp.dot(w1_ref[...], pooled_w, preferred_element_type=jnp.float32) + b1

    # --- h_swish activation ---
    y_h = _hswish(y_h)                                                      # (mip, H)
    y_w = _hswish(y_w)                                                      # (mip, W)

    # --- 1x1 conv2 / conv3 + sigmoid gates ---
    a_h = _sigmoid(
        jnp.dot(w2_ref[...], y_h, preferred_element_type=jnp.float32) + b2_ref[...])  # (C, H)
    a_w = _sigmoid(
        jnp.dot(w3_ref[...], y_w, preferred_element_type=jnp.float32) + b3_ref[...])  # (C, W)

    # --- expand gates to (C, HW) with constant 0/1 expander matrices ---
    g_h = jnp.dot(a_h, eh_ref[...], preferred_element_type=jnp.float32)     # (C, HW)
    g_w = jnp.dot(a_w, ew_ref[...], preferred_element_type=jnp.float32)     # (C, HW)

    # out = identity * a_w * a_h + x == x * (a_h * a_w + 1)
    o_ref[0] = (x * (g_h * g_w + 1.0)).astype(o_ref.dtype)


def coord_att(x, conv1_w, conv1_b, bn_gamma, bn_beta, bn_mean, bn_var,
              conv2_w, conv2_b, conv3_w, conv3_b, *, eps=1e-5):
    """Fused CoordAtt forward on an NCHW tensor via a single Pallas TPU kernel."""
    n, c, h, w = x.shape
    mip = conv1_w.shape[0]
    oup = conv2_w.shape[0]
    assert conv1_w.shape == (mip, c)
    assert conv2_w.shape == (oup, mip) and conv3_w.shape == (oup, mip)
    assert oup == c, "CoordAtt requires oup == inp for the final modulation"
    hw = h * w
    f32 = jnp.float32

    # Fold eval-mode BatchNorm into conv1: BN(W1 p + b1) = W1f p + b1f
    inv_std = 1.0 / jnp.sqrt(bn_var.astype(f32) + eps)
    scale = bn_gamma.astype(f32) * inv_std                                   # (mip,)
    w1f = conv1_w.astype(f32) * scale[:, None]                               # (mip, C)
    b1f = ((conv1_b.astype(f32) - bn_mean.astype(f32)) * scale
           + bn_beta.astype(f32)).reshape(mip, 1)                            # (mip, 1)
    b2 = conv2_b.astype(f32).reshape(oup, 1)
    b3 = conv3_b.astype(f32).reshape(oup, 1)

    # Constant matrices: eh[h', h*W+w] = 1{h'==h}, ew[w', h*W+w] = 1{w'==w}
    eh = jnp.kron(jnp.eye(h, dtype=f32), jnp.ones((1, w), dtype=f32))        # (H, HW)
    ew = jnp.tile(jnp.eye(w, dtype=f32), (1, h))                             # (W, HW)
    ph = eh.T * (1.0 / w)   # (HW, H): x2 @ ph = mean over W
    pw = ew.T * (1.0 / h)   # (HW, W): x2 @ pw = mean over H

    x2 = x.reshape(n, c, hw)   # contiguous merge of trailing dims -> free

    def wspec(shape):
        return pl.BlockSpec(shape, lambda i, _s=len(shape): (0,) * _s)

    out2 = pl.pallas_call(
        _coordatt_kernel,
        out_shape=jax.ShapeDtypeStruct((n, c, hw), x.dtype),
        grid_spec=pltpu.PrefetchScalarGridSpec(
            num_scalar_prefetch=0,
            grid=(n,),
            in_specs=[
                pl.BlockSpec((1, c, hw), lambda i: (i, 0, 0)),   # x
                wspec((mip, c)),   # conv1 weight (BN folded)
                wspec((mip, 1)),   # conv1 bias (BN folded)
                wspec((oup, mip)), # conv2 weight
                wspec((oup, 1)),   # conv2 bias
                wspec((oup, mip)), # conv3 weight
                wspec((oup, 1)),   # conv3 bias
                wspec((hw, h)),    # pooling matrix over W
                wspec((hw, w)),    # pooling matrix over H
                wspec((h, hw)),    # gate expander (h-branch)
                wspec((w, hw)),    # gate expander (w-branch)
            ],
            out_specs=pl.BlockSpec((1, c, hw), lambda i: (i, 0, 0)),
        ),
        compiler_params=pltpu.CompilerParams(
            dimension_semantics=("parallel",)),
    )(x2, w1f, b1f, conv2_w.astype(f32), b2, conv3_w.astype(f32), b3,
      ph, pw, eh, ew)

    return out2.reshape(n, c, h, w)


def coord_att_ref(x, conv1_w, conv1_b, bn_gamma, bn_beta, bn_mean, bn_var,
                  conv2_w, conv2_b, conv3_w, conv3_b, *, eps=1e-5):
    """Pure-JAX reference mirroring the PyTorch module (eval-mode BN)."""
    n, c, h, w = x.shape
    x_h = jnp.mean(x, axis=3)                                   # (n, c, h)
    x_w = jnp.mean(x, axis=2)                                   # (n, c, w)
    y = jnp.concatenate([x_h, x_w], axis=2)                     # (n, c, h+w)
    y = jnp.einsum('mc,ncl->nml', conv1_w, y) + conv1_b[None, :, None]
    y = (bn_gamma[None, :, None] * (y - bn_mean[None, :, None])
         / jnp.sqrt(bn_var[None, :, None] + eps) + bn_beta[None, :, None])
    y = y * jnp.clip(y + 3.0, 0.0, 6.0) / 6.0                   # h_swish
    a_h = jax.nn.sigmoid(
        jnp.einsum('om,nmh->noh', conv2_w, y[:, :, :h]) + conv2_b[None, :, None])
    a_w = jax.nn.sigmoid(
        jnp.einsum('om,nmw->now', conv3_w, y[:, :, h:]) + conv3_b[None, :, None])
    return x * a_w[:, :, None, :] * a_h[:, :, :, None] + x


if __name__ == "__main__":
    key = jax.random.PRNGKey(0)
    keys = jax.random.split(key, 11)

    N, C, H, W = 2, 4, 16, 16
    groups = 32
    inp = oup = C
    mip = max(8, inp // groups)   # = 8

    x = jax.random.normal(keys[0], (N, C, H, W), dtype=jnp.float32)

    conv1_w = 0.3 * jax.random.normal(keys[1], (mip, inp), jnp.float32)
    conv1_b = 0.1 * jax.random.normal(keys[2], (mip,), jnp.float32)
    bn_gamma = 1.0 + 0.2 * jax.random.normal(keys[3], (mip,), jnp.float32)
    bn_beta = 0.1 * jax.random.normal(keys[4], (mip,), jnp.float32)
    bn_mean = 0.1 * jax.random.normal(keys[5], (mip,), jnp.float32)
    bn_var = 0.5 + jax.random.uniform(keys[6], (mip,), jnp.float32)
    conv2_w = 0.3 * jax.random.normal(keys[7], (oup, mip), jnp.float32)
    conv2_b = 0.1 * jax.random.normal(keys[8], (oup,), jnp.float32)
    conv3_w = 0.3 * jax.random.normal(keys[9], (oup, mip), jnp.float32)
    conv3_b = 0.1 * jax.random.normal(keys[10], (oup,), jnp.float32)

    y = coord_att(x, conv1_w, conv1_b, bn_gamma, bn_beta, bn_mean, bn_var,
                  conv2_w, conv2_b, conv3_w, conv3_b)
    y = jax.block_until_ready(y)

    y_ref = coord_att_ref(x, conv1_w, conv1_b, bn_gamma, bn_beta, bn_mean,
                          bn_var, conv2_w, conv2_b, conv3_w, conv3_b)

    assert y.shape == x.shape and y.dtype == x.dtype
    max_err = float(jnp.max(jnp.abs(y - y_ref)))
    assert jnp.allclose(y, y_ref, atol=1e-4, rtol=1e-4), f"max abs err {max_err}"

    print("KERNEL_OK")
</pallas_src>

<mosaic_0001>
module attributes {stable_mosaic.version = 11 : i64} {
  func.func @_coordatt_kernel(%arg0: i32, %arg1: memref<1x4x256xf32, #tpu.memory_space<vmem>>, %arg2: memref<8x4xf32, #tpu.memory_space<vmem>>, %arg3: memref<8x1xf32, #tpu.memory_space<vmem>>, %arg4: memref<4x8xf32, #tpu.memory_space<vmem>>, %arg5: memref<4x1xf32, #tpu.memory_space<vmem>>, %arg6: memref<4x8xf32, #tpu.memory_space<vmem>>, %arg7: memref<4x1xf32, #tpu.memory_space<vmem>>, %arg8: memref<256x16xf32, #tpu.memory_space<vmem>>, %arg9: memref<256x16xf32, #tpu.memory_space<vmem>>, %arg10: memref<16x256xf32, #tpu.memory_space<vmem>>, %arg11: memref<16x256xf32, #tpu.memory_space<vmem>>, %arg12: memref<1x4x256xf32, #tpu.memory_space<vmem>>) attributes {dimension_semantics = [#tpu.dimension_semantics<parallel>], iteration_bounds = array<i64: 2>, scalar_prefetch = 0 : i64, scratch_operands = 0 : i64, tpu.core_type = #tpu.core_type<tc>, window_params = [{transform_indices = @transform_0, window_bounds = array<i64: 1, 4, 256>}, {pipeline_mode = #tpu.pipeline_mode<synchronous>, transform_indices = @transform_1, window_bounds = array<i64: 8, 4>}, {pipeline_mode = #tpu.pipeline_mode<synchronous>, transform_indices = @transform_2, window_bounds = array<i64: 8, 1>}, {pipeline_mode = #tpu.pipeline_mode<synchronous>, transform_indices = @transform_3, window_bounds = array<i64: 4, 8>}, {pipeline_mode = #tpu.pipeline_mode<synchronous>, transform_indices = @transform_4, window_bounds = array<i64: 4, 1>}, {pipeline_mode = #tpu.pipeline_mode<synchronous>, transform_indices = @transform_5, window_bounds = array<i64: 4, 8>}, {pipeline_mode = #tpu.pipeline_mode<synchronous>, transform_indices = @transform_6, window_bounds = array<i64: 4, 1>}, {pipeline_mode = #tpu.pipeline_mode<synchronous>, transform_indices = @transform_7, window_bounds = array<i64: 256, 16>}, {pipeline_mode = #tpu.pipeline_mode<synchronous>, transform_indices = @transform_8, window_bounds = array<i64: 256, 16>}, {pipeline_mode = #tpu.pipeline_mode<synchronous>, transform_indices = @transform_9, window_bounds = array<i64: 16, 256>}, {pipeline_mode = #tpu.pipeline_mode<synchronous>, transform_indices = @transform_10, window_bounds = array<i64: 16, 256>}, {transform_indices = @transform_11, window_bounds = array<i64: 1, 4, 256>}]} {
    %c0 = arith.constant 0 : index
    %c0_0 = arith.constant 0 : index
    %c0_1 = arith.constant 0 : index
    %0 = vector.load %arg1[%c0, %c0_0, %c0_1] : memref<1x4x256xf32, #tpu.memory_space<vmem>>, vector<1x4x256xf32>
    %1 = vector.shape_cast %0 : vector<1x4x256xf32> to vector<4x256xf32>
    %c0_2 = arith.constant 0 : index
    %c0_3 = arith.constant 0 : index
    %2 = vector.load %arg8[%c0_2, %c0_3] : memref<256x16xf32, #tpu.memory_space<vmem>>, vector<256x16xf32>
    %cst = arith.constant dense<0.000000e+00> : vector<4x16xf32>
    %3 = tpu.matmul %1, %2, %cst {dimension_numbers = #tpu.dot_dimension_numbers<[1], [0], [0], [1], [0, 0, 1, 1], [], []>} : vector<4x256xf32>, vector<256x16xf32>, vector<4x16xf32> -> vector<4x16xf32>
    %c0_4 = arith.constant 0 : index
    %c0_5 = arith.constant 0 : index
    %4 = vector.load %arg9[%c0_4, %c0_5] : memref<256x16xf32, #tpu.memory_space<vmem>>, vector<256x16xf32>
    %cst_6 = arith.constant dense<0.000000e+00> : vector<4x16xf32>
    %5 = tpu.matmul %1, %4, %cst_6 {dimension_numbers = #tpu.dot_dimension_numbers<[1], [0], [0], [1], [0, 0, 1, 1], [], []>} : vector<4x256xf32>, vector<256x16xf32>, vector<4x16xf32> -> vector<4x16xf32>
    %c0_7 = arith.constant 0 : index
    %c0_8 = arith.constant 0 : index
    %6 = vector.load %arg3[%c0_7, %c0_8] : memref<8x1xf32, #tpu.memory_space<vmem>>, vector<8x1xf32>
    %c0_9 = arith.constant 0 : index
    %c0_10 = arith.constant 0 : index
    %7 = vector.load %arg2[%c0_9, %c0_10] : memref<8x4xf32, #tpu.memory_space<vmem>>, vector<8x4xf32>
    %cst_11 = arith.constant dense<0.000000e+00> : vector<8x16xf32>
    %8 = tpu.matmul %7, %3, %cst_11 {dimension_numbers = #tpu.dot_dimension_numbers<[1], [0], [0], [1], [0, 0, 1, 1], [], []>} : vector<8x4xf32>, vector<4x16xf32>, vector<8x16xf32> -> vector<8x16xf32>
    %9 = vector.broadcast %6 : vector<8x1xf32> to vector<8x16xf32>
    %10 = arith.addf %8, %9 : vector<8x16xf32>
    %c0_12 = arith.constant 0 : index
    %c0_13 = arith.constant 0 : index
    %11 = vector.load %arg2[%c0_12, %c0_13] : memref<8x4xf32, #tpu.memory_space<vmem>>, vector<8x4xf32>
    %cst_14 = arith.constant dense<0.000000e+00> : vector<8x16xf32>
    %12 = tpu.matmul %11, %5, %cst_14 {dimension_numbers = #tpu.dot_dimension_numbers<[1], [0], [0], [1], [0, 0, 1, 1], [], []>} : vector<8x4xf32>, vector<4x16xf32>, vector<8x16xf32> -> vector<8x16xf32>
    %13 = vector.broadcast %6 : vector<8x1xf32> to vector<8x16xf32>
    %14 = arith.addf %12, %13 : vector<8x16xf32>
    %cst_15 = arith.constant 3.000000e+00 : f32
    %15 = vector.broadcast %cst_15 : f32 to vector<8x16xf32>
    %16 = arith.addf %10, %15 : vector<8x16xf32>
    %cst_16 = arith.constant 0.000000e+00 : f32
    %cst_17 = arith.constant 6.000000e+00 : f32
    %17 = vector.broadcast %cst_16 : f32 to vector<8x16xf32>
    %18 = arith.maximumf %17, %16 : vector<8x16xf32>
    %19 = vector.broadcast %cst_17 : f32 to vector<8x16xf32>
    %20 = arith.minimumf %19, %18 : vector<8x16xf32>
    %cst_18 = arith.constant 0.166666672 : f32
    %21 = vector.broadcast %cst_18 : f32 to vector<8x16xf32>
    %22 = arith.mulf %20, %21 : vector<8x16xf32>
    %23 = arith.mulf %10, %22 : vector<8x16xf32>
    %cst_19 = arith.constant 3.000000e+00 : f32
    %24 = vector.broadcast %cst_19 : f32 to vector<8x16xf32>
    %25 = arith.addf %14, %24 : vector<8x16xf32>
    %cst_20 = arith.constant 0.000000e+00 : f32
    %cst_21 = arith.constant 6.000000e+00 : f32
    %26 = vector.broadcast %cst_20 : f32 to vector<8x16xf32>
    %27 = arith.maximumf %26, %25 : vector<8x16xf32>
    %28 = vector.broadcast %cst_21 : f32 to vector<8x16xf32>
    %29 = arith.minimumf %28, %27 : vector<8x16xf32>
    %cst_22 = arith.constant 0.166666672 : f32
    %30 = vector.broadcast %cst_22 : f32 to vector<8x16xf32>
    %31 = arith.mulf %29, %30 : vector<8x16xf32>
    %32 = arith.mulf %14, %31 : vector<8x16xf32>
    %c0_23 = arith.constant 0 : index
    %c0_24 = arith.constant 0 : index
    %33 = vector.load %arg4[%c0_23, %c0_24] : memref<4x8xf32, #tpu.memory_space<vmem>>, vector<4x8xf32>
    %cst_25 = arith.constant dense<0.000000e+00> : vector<4x16xf32>
    %34 = tpu.matmul %33, %23, %cst_25 {dimension_numbers = #tpu.dot_dimension_numbers<[1], [0], [0], [1], [0, 0, 1, 1], [], []>} : vector<4x8xf32>, vector<8x16xf32>, vector<4x16xf32> -> vector<4x16xf32>
    %c0_26 = arith.constant 0 : index
    %c0_27 = arith.constant 0 : index
    %35 = vector.load %arg5[%c0_26, %c0_27] : memref<4x1xf32, #tpu.memory_space<vmem>>, vector<4x1xf32>
    %36 = vector.broadcast %35 : vector<4x1xf32> to vector<4x16xf32>
    %37 = arith.addf %34, %36 : vector<4x16xf32>
    %cst_28 = arith.constant 0.000000e+00 : f32
    %38 = vector.broadcast %cst_28 : f32 to vector<4x16xf32>
    %39 = arith.subf %38, %37 : vector<4x16xf32>
    %40 = math.exp %39 : vector<4x16xf32>
    %cst_29 = arith.constant 1.000000e+00 : f32
    %41 = vector.broadcast %cst_29 : f32 to vector<4x16xf32>
    %42 = arith.addf %41, %40 : vector<4x16xf32>
    %cst_30 = arith.constant 1.000000e+00 : f32
    %43 = vector.broadcast %cst_30 : f32 to vector<4x16xf32>
    %44 = arith.divf %43, %42 : vector<4x16xf32>
    %c0_31 = arith.constant 0 : index
    %c0_32 = arith.constant 0 : index
    %45 = vector.load %arg6[%c0_31, %c0_32] : memref<4x8xf32, #tpu.memory_space<vmem>>, vector<4x8xf32>
    %cst_33 = arith.constant dense<0.000000e+00> : vector<4x16xf32>
    %46 = tpu.matmul %45, %32, %cst_33 {dimension_numbers = #tpu.dot_dimension_numbers<[1], [0], [0], [1], [0, 0, 1, 1], [], []>} : vector<4x8xf32>, vector<8x16xf32>, vector<4x16xf32> -> vector<4x16xf32>
    %c0_34 = arith.constant 0 : index
    %c0_35 = arith.constant 0 : index
    %47 = vector.load %arg7[%c0_34, %c0_35] : memref<4x1xf32, #tpu.memory_space<vmem>>, vector<4x1xf32>
    %48 = vector.broadcast %47 : vector<4x1xf32> to vector<4x16xf32>
    %49 = arith.addf %46, %48 : vector<4x16xf32>
    %cst_36 = arith.constant 0.000000e+00 : f32
    %50 = vector.broadcast %cst_36 : f32 to vector<4x16xf32>
    %51 = arith.subf %50, %49 : vector<4x16xf32>
    %52 = math.exp %51 : vector<4x16xf32>
    %cst_37 = arith.constant 1.000000e+00 : f32
    %53 = vector.broadcast %cst_37 : f32 to vector<4x16xf32>
    %54 = arith.addf %53, %52 : vector<4x16xf32>
    %cst_38 = arith.constant 1.000000e+00 : f32
    %55 = vector.broadcast %cst_38 : f32 to vector<4x16xf32>
    %56 = arith.divf %55, %54 : vector<4x16xf32>
    %c0_39 = arith.constant 0 : index
    %c0_40 = arith.constant 0 : index
    %57 = vector.load %arg10[%c0_39, %c0_40] : memref<16x256xf32, #tpu.memory_space<vmem>>, vector<16x256xf32>
    %cst_41 = arith.constant dense<0.000000e+00> : vector<4x256xf32>
    %58 = tpu.matmul %44, %57, %cst_41 {dimension_numbers = #tpu.dot_dimension_numbers<[1], [0], [0], [1], [0, 0, 1, 1], [], []>} : vector<4x16xf32>, vector<16x256xf32>, vector<4x256xf32> -> vector<4x256xf32>
    %c0_42 = arith.constant 0 : index
    %c0_43 = arith.constant 0 : index
    %59 = vector.load %arg11[%c0_42, %c0_43] : memref<16x256xf32, #tpu.memory_space<vmem>>, vector<16x256xf32>
    %cst_44 = arith.constant dense<0.000000e+00> : vector<4x256xf32>
    %60 = tpu.matmul %56, %59, %cst_44 {dimension_numbers = #tpu.dot_dimension_numbers<[1], [0], [0], [1], [0, 0, 1, 1], [], []>} : vector<4x16xf32>, vector<16x256xf32>, vector<4x256xf32> -> vector<4x256xf32>
    %61 = arith.mulf %58, %60 : vector<4x256xf32>
    %cst_45 = arith.constant 1.000000e+00 : f32
    %62 = vector.broadcast %cst_45 : f32 to vector<4x256xf32>
    %63 = arith.addf %61, %62 : vector<4x256xf32>
    %64 = arith.mulf %1, %63 : vector<4x256xf32>
    %c0_46 = arith.constant 0 : index
    %c0_47 = arith.constant 0 : index
    %c0_48 = arith.constant 0 : index
    %65 = vector.load %arg12[%c0_46, %c0_47, %c0_48] : memref<1x4x256xf32, #tpu.memory_space<vmem>>, vector<1x4x256xf32>
    %66 = vector.shape_cast %65 : vector<1x4x256xf32> to vector<4x256xf32>
    %67 = vector.shape_cast %64 : vector<4x256xf32> to vector<1x4x256xf32>
    tpu.vector_store %arg12[%c0_46, %c0_47, %c0_48], %67 {strides = array<i32>} : memref<1x4x256xf32, #tpu.memory_space<vmem>>, vector<1x4x256xf32>,
    return
  }
  func.func @transform_0(%arg0: i32) -> (i32, i32, i32) {
    %c0_i32 = arith.constant 0 : i32
    %c0_i32_0 = arith.constant 0 : i32
    %c0_i32_1 = arith.constant 0 : i32
    return %arg0, %c0_i32, %c0_i32_0 : i32, i32, i32
  }
  func.func @transform_1(%arg0: i32) -> (i32, i32) {
    %c0_i32 = arith.constant 0 : i32
    %c0_i32_0 = arith.constant 0 : i32
    %c0_i32_1 = arith.constant 0 : i32
    return %c0_i32, %c0_i32_0 : i32, i32
  }
  func.func @transform_2(%arg0: i32) -> (i32, i32) {
    %c0_i32 = arith.constant 0 : i32
    %c0_i32_0 = arith.constant 0 : i32
    %c0_i32_1 = arith.constant 0 : i32
    return %c0_i32, %c0_i32_0 : i32, i32
  }
  func.func @transform_3(%arg0: i32) -> (i32, i32) {
    %c0_i32 = arith.constant 0 : i32
    %c0_i32_0 = arith.constant 0 : i32
    %c0_i32_1 = arith.constant 0 : i32
    return %c0_i32, %c0_i32_0 : i32, i32
  }
  func.func @transform_4(%arg0: i32) -> (i32, i32) {
    %c0_i32 = arith.constant 0 : i32
    %c0_i32_0 = arith.constant 0 : i32
    %c0_i32_1 = arith.constant 0 : i32
    return %c0_i32, %c0_i32_0 : i32, i32
  }
  func.func @transform_5(%arg0: i32) -> (i32, i32) {
    %c0_i32 = arith.constant 0 : i32
    %c0_i32_0 = arith.constant 0 : i32
    %c0_i32_1 = arith.constant 0 : i32
    return %c0_i32, %c0_i32_0 : i32, i32
  }
  func.func @transform_6(%arg0: i32) -> (i32, i32) {
    %c0_i32 = arith.constant 0 : i32
    %c0_i32_0 = arith.constant 0 : i32
    %c0_i32_1 = arith.constant 0 : i32
    return %c0_i32, %c0_i32_0 : i32, i32
  }
  func.func @transform_7(%arg0: i32) -> (i32, i32) {
    %c0_i32 = arith.constant 0 : i32
    %c0_i32_0 = arith.constant 0 : i32
    %c0_i32_1 = arith.constant 0 : i32
    return %c0_i32, %c0_i32_0 : i32, i32
  }
  func.func @transform_8(%arg0: i32) -> (i32, i32) {
    %c0_i32 = arith.constant 0 : i32
    %c0_i32_0 = arith.constant 0 : i32
    %c0_i32_1 = arith.constant 0 : i32
    return %c0_i32, %c0_i32_0 : i32, i32
  }
  func.func @transform_9(%arg0: i32) -> (i32, i32) {
    %c0_i32 = arith.constant 0 : i32
    %c0_i32_0 = arith.constant 0 : i32
    %c0_i32_1 = arith.constant 0 : i32
    return %c0_i32, %c0_i32_0 : i32, i32
  }
  func.func @transform_10(%arg0: i32) -> (i32, i32) {
    %c0_i32 = arith.constant 0 : i32
    %c0_i32_0 = arith.constant 0 : i32
    %c0_i32_1 = arith.constant 0 : i32
    return %c0_i32, %c0_i32_0 : i32, i32
  }
  func.func @transform_11(%arg0: i32) -> (i32, i32, i32) {
    %c0_i32 = arith.constant 0 : i32
    %c0_i32_0 = arith.constant 0 : i32
    %c0_i32_1 = arith.constant 0 : i32
    return %arg0, %c0_i32, %c0_i32_0 : i32, i32, i32
  }
}

</mosaic_0001>

<llo_original>
// kernel: tpu_custom_call.1
$region0: #{tpu_custom_call.1}
  #allocation0 [shape = 'u32[]', space=smem, size = 0x4, offset = 0x4, fixed_abs, tag = 'smem constant byte address 0x4 - core index']
  #allocation1 [shape = 'u32[144,128]{1,0:T(1,128)}', space=vmem, size = 0x12000, scoped, tag = 'internal scratch']
  %s0 = inlined_call_operand.vmem [shape: f32[2,4,256], index: 0, kind: input, shape index: {}]
  %s1 = inlined_call_operand.vmem [shape: f32[8,4], index: 1, kind: input, shape index: {}]
  %s2 = inlined_call_operand.vmem [shape: f32[8,1], index: 2, kind: input, shape index: {}]
  %s3 = inlined_call_operand.vmem [shape: f32[4,8], index: 3, kind: input, shape index: {}]
  %s4 = inlined_call_operand.vmem [shape: f32[4,1], index: 4, kind: input, shape index: {}]
  %s5 = inlined_call_operand.vmem [shape: f32[4,8], index: 5, kind: input, shape index: {}]
  %s6 = inlined_call_operand.vmem [shape: f32[4,1], index: 6, kind: input, shape index: {}]
  %s7 = inlined_call_operand.vmem [shape: f32[256,16], index: 7, kind: input, shape index: {}]
  %s8 = inlined_call_operand.vmem [shape: f32[256,16], index: 8, kind: input, shape index: {}]
  %s9 = inlined_call_operand.vmem [shape: f32[16,256], index: 9, kind: input, shape index: {}]
  %s10 = inlined_call_operand.vmem [shape: f32[16,256], index: 10, kind: input, shape index: {}]
  %s11 = inlined_call_operand.hbm [shape: f32[2,4,256], index: 11, kind: output, shape index: {}]
  %s12 = sld [smem:[#allocation0]]
  $region77: #{tpu_custom_call.1} parent=0
    _
  %s14 = ssub.s32 1, %s12
  %s15 = scalar_select 0, %s14, %s12
  $region1: #{tpu_custom_call.1} parent=0
    #allocation2 [shape = 'u8[8192]{0}', space=vmem, size = 0x2000, scoped, tag = 'output window, operand 0']
    #allocation3 [shape = 's32[2]{0}', space=sflag, size = 0x8, scoped, tag = 'scoped memory for tpu_custom_call.1']
    %16 = vsyncpa [#allocation3], 0
    %s17 = scalar_lea.sflag [#allocation3], 1
    %18 = vsyncpa %s17, 0
    loop: start=0, step=1, limit=4
    $region2: #{tpu_custom_call.1} parent=1 // loop_pre_header
      _
    $region3: #{tpu_custom_call.1} parent=1 // loop_header
      %s20 = sphi 0, %s24
      %p21 = scmp.ge.s32.totalorder %s20, 4
      %s30 = sphi 0, %s32
      %s33 = sphi 0, %s30
      %s34 = sphi 0, %s33
      %s50 = sphi 0, %s34
      %s54 = sphi 0, %s54
      %s56 = sphi 0, %s54
      %s57 = sphi 0, %s56
      %s71 = sphi 0, %s57
      %s75 = sphi 0, %s75
      %s77 = sphi 0, %s75
      %s78 = sphi 0, %s77
      %s92 = sphi 0, %s78
      %s96 = sphi 0, %s96
      %s98 = sphi 0, %s96
      %s99 = sphi 0, %s98
      %s113 = sphi 0, %s99
      %s117 = sphi 0, %s117
      %s119 = sphi 0, %s117
      %s120 = sphi 0, %s119
      %s134 = sphi 0, %s120
      %s138 = sphi 0, %s138
      %s140 = sphi 0, %s138
      %s141 = sphi 0, %s140
      %s155 = sphi 0, %s141
      %s159 = sphi 0, %s159
      %s161 = sphi 0, %s159
      %s162 = sphi 0, %s161
      %s176 = sphi 0, %s162
      %s180 = sphi 0, %s180
      %s182 = sphi 0, %s180
      %s183 = sphi 0, %s182
      %s197 = sphi 0, %s183
      %s201 = sphi 0, %s201
      %s203 = sphi 0, %s201
      %s204 = sphi 0, %s203
      %s218 = sphi 0, %s204
      %s222 = sphi 0, %s222
      %s224 = sphi 0, %s222
      %s225 = sphi 0, %s224
      %s239 = sphi 0, %s225
      %s243 = sphi 0, %s243
      %s245 = sphi 0, %s243
      %s246 = sphi 0, %s245
      %s260 = sphi 0, %s246
      %s266 = sphi 0, %s268
      %s269 = sphi 0, %s266
      %s270 = sphi 0, %s269
      %s286 = sphi 0, %s270
    $region4: #{tpu_custom_call.1} parent=1 // loop_header_branch
      %23 = sbr.rel (%p21) target = $region8
    $region5: #{tpu_custom_call.1} parent=1 // loop_body
      %s25 = ssub.s32 %s20, 1
      %s26 = ssub.s32 %s20, 2
      %s27 = sadd.s32 %s20, 1
      %s28 = ssub.s32 %s20, %s27
      %p29 = scmp.eq.s32.totalorder %s28, 0
      %s31 = sadd.s32 %s30, 1
      %s32 = scalar_select %p29, %s30, %s31
      %p35 = pneg %p29
      %p36 = scmp.eq.s32.totalorder %s20, 1
      %p37 = por %p35, %p36
      %p38 = scmp.ne.s32.totalorder %s30, %s33
      %p39 = scmp.eq.s32.totalorder %s20, 0
      %p40 = por %p38, %p39
      %p41 = scmp.ne.s32.totalorder %s30, %s33
      %p42 = scmp.eq.s32.totalorder %s25, 1
      %p43 = por %p41, %p42
      %p44 = scmp.ne.s32.totalorder %s33, %s34
      %p45 = scmp.eq.s32.totalorder %s25, 0
      %p46 = por %p44, %p45
      %p47 = scmp.ne.s32.totalorder %s33, %s34
      %p48 = scmp.eq.s32.totalorder %s26, 1
      %p49 = por %p47, %p48
      %p51 = scmp.ne.s32.totalorder %s34, %s50
      %p52 = scmp.eq.s32.totalorder %s26, 0
      %p53 = por %p51, %p52
      %s55 = sadd.s32 %s54, 1
      %p58 = scmp.eq.s32.totalorder %s20, 1
      %p59 = scmp.ne.s32.totalorder %s54, %s56
      %p60 = scmp.eq.s32.totalorder %s20, 0
      %p61 = por %p59, %p60
      %p62 = scmp.ne.s32.totalorder %s54, %s56
      %p63 = scmp.eq.s32.totalorder %s25, 1
      %p64 = por %p62, %p63
      %p65 = scmp.ne.s32.totalorder %s56, %s57
      %p66 = scmp.eq.s32.totalorder %s25, 0
      %p67 = por %p65, %p66
      %p68 = scmp.ne.s32.totalorder %s56, %s57
      %p69 = scmp.eq.s32.totalorder %s26, 1
      %p70 = por %p68, %p69
      %p72 = scmp.ne.s32.totalorder %s57, %s71
      %p73 = scmp.eq.s32.totalorder %s26, 0
      %p74 = por %p72, %p73
      %s76 = sadd.s32 %s75, 1
      %p79 = scmp.eq.s32.totalorder %s20, 1
      %p80 = scmp.ne.s32.totalorder %s75, %s77
      %p81 = scmp.eq.s32.totalorder %s20, 0
      %p82 = por %p80, %p81
      %p83 = scmp.ne.s32.totalorder %s75, %s77
      %p84 = scmp.eq.s32.totalorder %s25, 1
      %p85 = por %p83, %p84
      %p86 = scmp.ne.s32.totalorder %s77, %s78
      %p87 = scmp.eq.s32.totalorder %s25, 0
      %p88 = por %p86, %p87
      %p89 = scmp.ne.s32.totalorder %s77, %s78
      %p90 = scmp.eq.s32.totalorder %s26, 1
      %p91 = por %p89, %p90
      %p93 = scmp.ne.s32.totalorder %s78, %s92
      %p94 = scmp.eq.s32.totalorder %s26, 0
      %p95 = por %p93, %p94
      %s97 = sadd.s32 %s96, 1
      %p100 = scmp.eq.s32.totalorder %s20, 1
      %p101 = scmp.ne.s32.totalorder %s96, %s98
      %p102 = scmp.eq.s32.totalorder %s20, 0
      %p103 = por %p101, %p102
      %p104 = scmp.ne.s32.totalorder %s96, %s98
      %p105 = scmp.eq.s32.totalorder %s25, 1
      %p106 = por %p104, %p105
      %p107 = scmp.ne.s32.totalorder %s98, %s99
      %p108 = scmp.eq.s32.totalorder %s25, 0
      %p109 = por %p107, %p108
      %p110 = scmp.ne.s32.totalorder %s98, %s99
      %p111 = scmp.eq.s32.totalorder %s26, 1
      %p112 = por %p110, %p111
      %p114 = scmp.ne.s32.totalorder %s99, %s113
      %p115 = scmp.eq.s32.totalorder %s26, 0
      %p116 = por %p114, %p115
      %s118 = sadd.s32 %s117, 1
      %p121 = scmp.eq.s32.totalorder %s20, 1
      %p122 = scmp.ne.s32.totalorder %s117, %s119
      %p123 = scmp.eq.s32.totalorder %s20, 0
      %p124 = por %p122, %p123
      %p125 = scmp.ne.s32.totalorder %s117, %s119
      %p126 = scmp.eq.s32.totalorder %s25, 1
      %p127 = por %p125, %p126
      %p128 = scmp.ne.s32.totalorder %s119, %s120
      %p129 = scmp.eq.s32.totalorder %s25, 0
      %p130 = por %p128, %p129
      %p131 = scmp.ne.s32.totalorder %s119, %s120
      %p132 = scmp.eq.s32.totalorder %s26, 1
      %p133 = por %p131, %p132
      %p135 = scmp.ne.s32.totalorder %s120, %s134
      %p136 = scmp.eq.s32.totalorder %s26, 0
      %p137 = por %p135, %p136
      %s139 = sadd.s32 %s138, 1
      %p142 = scmp.eq.s32.totalorder %s20, 1
      %p143 = scmp.ne.s32.totalorder %s138, %s140
      %p144 = scmp.eq.s32.totalorder %s20, 0
      %p145 = por %p143, %p144
      %p146 = scmp.ne.s32.totalorder %s138, %s140
      %p147 = scmp.eq.s32.totalorder %s25, 1
      %p148 = por %p146, %p147
      %p149 = scmp.ne.s32.totalorder %s140, %s141
      %p150 = scmp.eq.s32.totalorder %s25, 0
      %p151 = por %p149, %p150
      %p152 = scmp.ne.s32.totalorder %s140, %s141
      %p153 = scmp.eq.s32.totalorder %s26, 1
      %p154 = por %p152, %p153
      %p156 = scmp.ne.s32.totalorder %s141, %s155
      %p157 = scmp.eq.s32.totalorder %s26, 0
      %p158 = por %p156, %p157
      %s160 = sadd.s32 %s159, 1
      %p163 = scmp.eq.s32.totalorder %s20, 1
      %p164 = scmp.ne.s32.totalorder %s159, %s161
      %p165 = scmp.eq.s32.totalorder %s20, 0
      %p166 = por %p164, %p165
      %p167 = scmp.ne.s32.totalorder %s159, %s161
      %p168 = scmp.eq.s32.totalorder %s25, 1
      %p169 = por %p167, %p168
      %p170 = scmp.ne.s32.totalorder %s161, %s162
      %p171 = scmp.eq.s32.totalorder %s25, 0
      %p172 = por %p170, %p171
      %p173 = scmp.ne.s32.totalorder %s161, %s162
      %p174 = scmp.eq.s32.totalorder %s26, 1
      %p175 = por %p173, %p174
      %p177 = scmp.ne.s32.totalorder %s162, %s176
      %p178 = scmp.eq.s32.totalorder %s26, 0
      %p179 = por %p177, %p178
      %s181 = sadd.s32 %s180, 1
      %p184 = scmp.eq.s32.totalorder %s20, 1
      %p185 = scmp.ne.s32.totalorder %s180, %s182
      %p186 = scmp.eq.s32.totalorder %s20, 0
      %p187 = por %p185, %p186
      %p188 = scmp.ne.s32.totalorder %s180, %s182
      %p189 = scmp.eq.s32.totalorder %s25, 1
      %p190 = por %p188, %p189
      %p191 = scmp.ne.s32.totalorder %s182, %s183
      %p192 = scmp.eq.s32.totalorder %s25, 0
      %p193 = por %p191, %p192
      %p194 = scmp.ne.s32.totalorder %s182, %s183
      %p195 = scmp.eq.s32.totalorder %s26, 1
      %p196 = por %p194, %p195
      %p198 = scmp.ne.s32.totalorder %s183, %s197
      %p199 = scmp.eq.s32.totalorder %s26, 0
      %p200 = por %p198, %p199
      %s202 = sadd.s32 %s201, 1
      %p205 = scmp.eq.s32.totalorder %s20, 1
      %p206 = scmp.ne.s32.totalorder %s201, %s203
      %p207 = scmp.eq.s32.totalorder %s20, 0
      %p208 = por %p206, %p207
      %p209 = scmp.ne.s32.totalorder %s201, %s203
      %p210 = scmp.eq.s32.totalorder %s25, 1
      %p211 = por %p209, %p210
      %p212 = scmp.ne.s32.totalorder %s203, %s204
      %p213 = scmp.eq.s32.totalorder %s25, 0
      %p214 = por %p212, %p213
      %p215 = scmp.ne.s32.totalorder %s203, %s204
      %p216 = scmp.eq.s32.totalorder %s26, 1
      %p217 = por %p215, %p216
      %p219 = scmp.ne.s32.totalorder %s204, %s218
      %p220 = scmp.eq.s32.totalorder %s26, 0
      %p221 = por %p219, %p220
      %s223 = sadd.s32 %s222, 1
      %p226 = scmp.eq.s32.totalorder %s20, 1
      %p227 = scmp.ne.s32.totalorder %s222, %s224
      %p228 = scmp.eq.s32.totalorder %s20, 0
      %p229 = por %p227, %p228
      %p230 = scmp.ne.s32.totalorder %s222, %s224
      %p231 = scmp.eq.s32.totalorder %s25, 1
      %p232 = por %p230, %p231
      %p233 = scmp.ne.s32.totalorder %s224, %s225
      %p234 = scmp.eq.s32.totalorder %s25, 0
      %p235 = por %p233, %p234
      %p236 = scmp.ne.s32.totalorder %s224, %s225
      %p237 = scmp.eq.s32.totalorder %s26, 1
      %p238 = por %p236, %p237
      %p240 = scmp.ne.s32.totalorder %s225, %s239
      %p241 = scmp.eq.s32.totalorder %s26, 0
      %p242 = por %p240, %p241
      %s244 = sadd.s32 %s243, 1
      %p247 = scmp.eq.s32.totalorder %s20, 1
      %p248 = scmp.ne.s32.totalorder %s243, %s245
      %p249 = scmp.eq.s32.totalorder %s20, 0
      %p250 = por %p248, %p249
      %p251 = scmp.ne.s32.totalorder %s243, %s245
      %p252 = scmp.eq.s32.totalorder %s25, 1
      %p253 = por %p251, %p252
      %p254 = scmp.ne.s32.totalorder %s245, %s246
      %p255 = scmp.eq.s32.totalorder %s25, 0
      %p256 = por %p254, %p255
      %p257 = scmp.ne.s32.totalorder %s245, %s246
      %p258 = scmp.eq.s32.totalorder %s26, 1
      %p259 = por %p257, %p258
      %p261 = scmp.ne.s32.totalorder %s246, %s260
      %p262 = scmp.eq.s32.totalorder %s26, 0
      %p263 = por %p261, %p262
      %s264 = ssub.s32 %s20, %s27
      %p265 = scmp.eq.s32.totalorder %s264, 0
      %s267 = sadd.s32 %s266, 1
      %s268 = scalar_select %p265, %s266, %s267
      %p271 = pneg %p265
      %p272 = scmp.eq.s32.totalorder %s20, 1
      %p273 = por %p271, %p272
      %p274 = scmp.ne.s32.totalorder %s266, %s269
      %p275 = scmp.eq.s32.totalorder %s20, 0
      %p276 = por %p274, %p275
      %p277 = scmp.ne.s32.totalorder %s266, %s269
      %p278 = scmp.eq.s32.totalorder %s25, 1
      %p279 = por %p277, %p278
      %p280 = scmp.ne.s32.totalorder %s269, %s270
      %p281 = scmp.eq.s32.totalorder %s25, 0
      %p282 = por %p280, %p281
      %p283 = scmp.ne.s32.totalorder %s269, %s270
      %p284 = scmp.eq.s32.totalorder %s26, 1
      %p285 = por %p283, %p284
      %p287 = scmp.ne.s32.totalorder %s270, %s286
      %p288 = scmp.eq.s32.totalorder %s26, 0
      %p289 = por %p287, %p288
      %p290 = scmp.le.s32.totalorder 1, %s20
      %p291 = scmp.lt.s32.totalorder %s20, 3
      %p292 = pnand %p290, %p291
      %p293 = pneg %p292
      // Predicated region
      $region9: #{tpu_custom_call.1} parent=5 // pred_check
        _
      $region10: #{tpu_custom_call.1} parent=5 // pred_check_branch
        %295 = sbr.rel (%p292) target = $region12
      $region11: #{tpu_custom_call.1} parent=5 // pred_region
        %s296 = ssub.s32 %s20, 1
        // Predicated region
        $region13: #{tpu_custom_call.1} parent=11 // pred_check
          %p297 = pneg %p67
        $region14: #{tpu_custom_call.1} parent=11 // pred_check_branch
          %299 = sbr.rel (%p297) target = $region16
        $region15: #{tpu_custom_call.1} parent=11 // pred_region
          _
        $region16: #{tpu_custom_call.1} parent=11 // pred_fallthru
          _
        // Predicated region
        $region17: #{tpu_custom_call.1} parent=11 // pred_check
          %p300 = pneg %p88
        $region18: #{tpu_custom_call.1} parent=11 // pred_check_branch
          %302 = sbr.rel (%p300) target = $region20
        $region19: #{tpu_custom_call.1} parent=11 // pred_region
          _
        $region20: #{tpu_custom_call.1} parent=11 // pred_fallthru
          _
        // Predicated region
        $region21: #{tpu_custom_call.1} parent=11 // pred_check
          %p303 = pneg %p109
        $region22: #{tpu_custom_call.1} parent=11 // pred_check_branch
          %305 = sbr.rel (%p303) target = $region24
        $region23: #{tpu_custom_call.1} parent=11 // pred_region
          _
        $region24: #{tpu_custom_call.1} parent=11 // pred_fallthru
          _
        // Predicated region
        $region25: #{tpu_custom_call.1} parent=11 // pred_check
          %p306 = pneg %p130
        $region26: #{tpu_custom_call.1} parent=11 // pred_check_branch
          %308 = sbr.rel (%p306) target = $region28
        $region27: #{tpu_custom_call.1} parent=11 // pred_region
          _
        $region28: #{tpu_custom_call.1} parent=11 // pred_fallthru
          _
        // Predicated region
        $region29: #{tpu_custom_call.1} parent=11 // pred_check
          %p309 = pneg %p151
        $region30: #{tpu_custom_call.1} parent=11 // pred_check_branch
          %311 = sbr.rel (%p309) target = $region32
        $region31: #{tpu_custom_call.1} parent=11 // pred_region
          _
        $region32: #{tpu_custom_call.1} parent=11 // pred_fallthru
          _
        // Predicated region
        $region33: #{tpu_custom_call.1} parent=11 // pred_check
          %p312 = pneg %p172
        $region34: #{tpu_custom_call.1} parent=11 // pred_check_branch
          %314 = sbr.rel (%p312) target = $region36
        $region35: #{tpu_custom_call.1} parent=11 // pred_region
          _
        $region36: #{tpu_custom_call.1} parent=11 // pred_fallthru
          _
        // Predicated region
        $region37: #{tpu_custom_call.1} parent=11 // pred_check
          %p315 = pneg %p193
        $region38: #{tpu_custom_call.1} parent=11 // pred_check_branch
          %317 = sbr.rel (%p315) target = $region40
        $region39: #{tpu_custom_call.1} parent=11 // pred_region
          _
        $region40: #{tpu_custom_call.1} parent=11 // pred_fallthru
          _
        // Predicated region
        $region41: #{tpu_custom_call.1} parent=11 // pred_check
          %p318 = pneg %p214
        $region42: #{tpu_custom_call.1} parent=11 // pred_check_branch
          %320 = sbr.rel (%p318) target = $region44
        $region43: #{tpu_custom_call.1} parent=11 // pred_region
          _
        $region44: #{tpu_custom_call.1} parent=11 // pred_fallthru
          _
        // Predicated region
        $region45: #{tpu_custom_call.1} parent=11 // pred_check
          %p321 = pneg %p235
        $region46: #{tpu_custom_call.1} parent=11 // pred_check_branch
          %323 = sbr.rel (%p321) target = $region48
        $region47: #{tpu_custom_call.1} parent=11 // pred_region
          _
        $region48: #{tpu_custom_call.1} parent=11 // pred_fallthru
          _
        // Predicated region
        $region49: #{tpu_custom_call.1} parent=11 // pred_check
          %p324 = pneg %p256
        $region50: #{tpu_custom_call.1} parent=11 // pred_check_branch
          %326 = sbr.rel (%p324) target = $region52
        $region51: #{tpu_custom_call.1} parent=11 // pred_region
          _
        $region52: #{tpu_custom_call.1} parent=11 // pred_fallthru
          _
      $region12: #{tpu_custom_call.1} parent=5 // pred_fallthru
        _
      %p327 = scmp.lt.s32.totalorder %s20, 2
      // Predicated region
      $region53: #{tpu_custom_call.1} parent=5 // pred_check
        %p328 = pneg %p327
      $region54: #{tpu_custom_call.1} parent=5 // pred_check_branch
        %330 = sbr.rel (%p328) target = $region56
      $region55: #{tpu_custom_call.1} parent=5 // pred_region
        // Predicated region
        $region57: #{tpu_custom_call.1} parent=55 // pred_check
          %p331 = pneg %p40
        $region58: #{tpu_custom_call.1} parent=55 // pred_check_branch
          %333 = sbr.rel (%p331) target = $region60
        $region59: #{tpu_custom_call.1} parent=55 // pred_region
          %p334 = scmp.lt.s32.totalorder %s20, 1
          %s335 = scalar_select %p334, %s20, 1
          %s336 = smul.addr %s335, 2
          %s337 = smul.addr %s336, 4
          %s338 = scalar_lea.vmem %s0, %s337
        $region60: #{tpu_custom_call.1} parent=55 // pred_fallthru
          _
      $region56: #{tpu_custom_call.1} parent=5 // pred_fallthru
        _
      %p339 = scmp.le.s32.totalorder 1, %s20
      %p340 = scmp.lt.s32.totalorder %s20, 3
      %p341 = pnand %p339, %p340
      %p342 = pneg %p341
      // Predicated region
      $region61: #{tpu_custom_call.1} parent=5 // pred_check
        _
      $region62: #{tpu_custom_call.1} parent=5 // pred_check_branch
        %344 = sbr.rel (%p341) target = $region64
      $region63: #{tpu_custom_call.1} parent=5 // pred_region
        %s345 = ssub.s32 %s20, 1
        %p346 = scmp.lt.s32.totalorder %s25, 1
        %s347 = scalar_select %p346, %s25, 1
        %s348 = smul.addr %s347, 2
        %s349 = smul.addr %s348, 4
        %s350 = scalar_lea.vmem %s0, %s349
        %p351 = pneg %p46
        %p352 = pneg %p43
        %p353 = pneg %p67
        %p354 = pneg %p64
        %p355 = pneg %p88
        %p356 = pneg %p85
        %p357 = pneg %p109
        %p358 = pneg %p106
        %p359 = pneg %p130
        %p360 = pneg %p127
        %p361 = pneg %p151
        %p362 = pneg %p148
        %p363 = pneg %p172
        %p364 = pneg %p169
        %p365 = pneg %p193
        %p366 = pneg %p190
        %p367 = pneg %p214
        %p368 = pneg %p211
        %p369 = pneg %p235
        %p370 = pneg %p232
        %p371 = pneg %p256
        %p372 = pneg %p253
        %p373 = pneg %p282
        %p374 = pneg %p279
        %s375 = sand.u32 %s269, 1
        %s376 = scalar_lea.sflag [#allocation3], %s375
        %s377 = sand.u32 %s269, 1
        %s378 = smul.addr %s377, 8
        %s379 = scalar_lea.vmem [#allocation2], %s378
        %p380 = scmp.lt.s32.totalorder %s25, 1
        %s381 = scalar_select %p380, %s25, 1
        %s382 = smul.addr %s381, 2
        %s383 = smul.addr %s382, 4
        %s384 = scalar_lea.vmem %s0, %s383
        %v385 = vld [vmem:[%s384] sm:$0xff]
        %v386 = vld [vmem:[%s7] sm:$0xff]
        %v387 = vld [vmem:[%s7 + $0x8] sm:$0xff]
        %v388 = vld [vmem:[%s7 + $0x10] sm:$0xff]
        %v389 = vld [vmem:[%s7 + $0x18] sm:$0xff]
        %v390 = vld [vmem:[%s7 + $0x20] sm:$0xff]
        %v391 = vld [vmem:[%s7 + $0x28] sm:$0xff]
        %v392 = vld [vmem:[%s7 + $0x30] sm:$0xff]
        %v393 = vld [vmem:[%s7 + $0x38] sm:$0xff]
        %v394 = vld [vmem:[%s7 + $0x40] sm:$0xff]
        %v395 = vld [vmem:[%s7 + $0x48] sm:$0xff]
        %v396 = vld [vmem:[%s7 + $0x50] sm:$0xff]
        %v397 = vld [vmem:[%s7 + $0x58] sm:$0xff]
        %v398 = vld [vmem:[%s7 + $0x60] sm:$0xff]
        %v399 = vld [vmem:[%s7 + $0x68] sm:$0xff]
        %v400 = vld [vmem:[%s7 + $0x70] sm:$0xff]
        %v401 = vld [vmem:[%s7 + $0x78] sm:$0xff]
        %v402 = vld [vmem:[%s7 + $0x80] sm:$0xff]
        %v403 = vld [vmem:[%s7 + $0x88] sm:$0xff]
        %v404 = vld [vmem:[%s7 + $0x90] sm:$0xff]
        %v405 = vld [vmem:[%s7 + $0x98] sm:$0xff]
        %v406 = vld [vmem:[%s7 + $0xa0] sm:$0xff]
        %v407 = vld [vmem:[%s7 + $0xa8] sm:$0xff]
        %v408 = vld [vmem:[%s7 + $0xb0] sm:$0xff]
        %v409 = vld [vmem:[%s7 + $0xb8] sm:$0xff]
        %v410 = vld [vmem:[%s7 + $0xc0] sm:$0xff]
        %v411 = vld [vmem:[%s7 + $0xc8] sm:$0xff]
        %v412 = vld [vmem:[%s7 + $0xd0] sm:$0xff]
        %v413 = vld [vmem:[%s7 + $0xd8] sm:$0xff]
        %v414 = vld [vmem:[%s7 + $0xe0] sm:$0xff]
        %v415 = vld [vmem:[%s7 + $0xe8] sm:$0xff]
        %v416 = vld [vmem:[%s7 + $0xf0] sm:$0xff]
        %v417 = vld [vmem:[%s7 + $0xf8] sm:$0xff]
        %v419 = vcombine.high %v385, %v385
        %421 = vmatprep.subr.mxu0 0.0
        %422 = vmatpush1.msra.mxu0 %v386
        %423 = vmatprep.subr.mxu0 0.0
        %424 = vmatpush1.msra.mxu0 %v387
        %425 = vmatprep.subr.mxu0 0.0
        %426 = vmatpush1.msra.mxu0 %v388
        %427 = vmatprep.subr.mxu0 0.0
        %428 = vmatpush1.msra.mxu0 %v389
        %429 = vmatprep.subr.mxu0 0.0
        %430 = vmatpush1.msra.mxu0 %v390
        %431 = vmatprep.subr.mxu0 0.0
        %432 = vmatpush1.msra.mxu0 %v391
        %433 = vmatprep.subr.mxu0 0.0
        %434 = vmatpush1.msra.mxu0 %v392
        %435 = vmatprep.subr.mxu0 0.0
        %436 = vmatpush1.msra.mxu0 %v393
        %437 = vmatprep.subr.mxu0 0.0
        %438 = vmatpush1.msra.mxu0 %v394
        %439 = vmatprep.subr.mxu0 0.0
        %440 = vmatpush1.msra.mxu0 %v395
        %441 = vmatprep.subr.mxu0 0.0
        %442 = vmatpush1.msra.mxu0 %v396
        %443 = vmatprep.subr.mxu0 0.0
        %444 = vmatpush1.msra.mxu0 %v397
        %445 = vmatprep.subr.mxu0 0.0
        %446 = vmatpush1.msra.mxu0 %v398
        %447 = vmatprep.subr.mxu0 0.0
        %448 = vmatpush1.msra.mxu0 %v399
        %449 = vmatprep.subr.mxu0 0.0
        %450 = vmatpush1.msra.mxu0 %v400
        %451 = vmatprep.subr.mxu0 0.0
        %452 = vmatpush1.msra.mxu0 %v401
        %453 = vmatprep.subr.mxu0 0.0
        %454 = vmatpush1.msra.mxu0 %v402
        %455 = vmatprep.subr.mxu0 0.0
        %456 = vmatpush1.msra.mxu0 %v403
        %457 = vmatprep.subr.mxu0 0.0
        %458 = vmatpush1.msra.mxu0 %v404
        %459 = vmatprep.subr.mxu0 0.0
        %460 = vmatpush1.msra.mxu0 %v405
        %461 = vmatprep.subr.mxu0 0.0
        %462 = vmatpush1.msra.mxu0 %v406
        %463 = vmatprep.subr.mxu0 0.0
        %464 = vmatpush1.msra.mxu0 %v407
        %465 = vmatprep.subr.mxu0 0.0
        %466 = vmatpush1.msra.mxu0 %v408
        %467 = vmatprep.subr.mxu0 0.0
        %468 = vmatpush1.msra.mxu0 %v409
        %469 = vmatprep.subr.mxu0 0.0
        %470 = vmatpush1.msra.mxu0 %v410
        %471 = vmatprep.subr.mxu0 0.0
        %472 = vmatpush1.msra.mxu0 %v411
        %473 = vmatprep.subr.mxu0 0.0
        %474 = vmatpush1.msra.mxu0 %v412
        %475 = vmatprep.subr.mxu0 0.0
        %476 = vmatpush1.msra.mxu0 %v413
        %477 = vmatprep.subr.mxu0 0.0
        %478 = vmatpush1.msra.mxu0 %v414
        %479 = vmatprep.subr.mxu0 0.0
        %480 = vmatpush1.msra.mxu0 %v415
        %481 = vmatprep.subr.mxu0 0.0
        %482 = vmatpush1.msra.mxu0 %v416
        %483 = vmatprep.subr.mxu0 0.0
        %484 = vmatpush1.msra.mxu0 %v417
        %485 = vmatprep.mubr.f32.mxu0 %v419
        %486 = vmatmul.mubr.f32.gmra.mrb[0].mxu0 %v385
        %v487 = vpop.f32.mrb[0].mxu0
        %v488 = vadd.f32 0.0, %v487
        %v489 = vpop.f32.mrb[0].mxu0
        %490 = vdwg.mxu0
        %v491 = vld [vmem:[%s8] sm:$0xff]
        %v492 = vld [vmem:[%s8 + $0x8] sm:$0xff]
        %v493 = vld [vmem:[%s8 + $0x10] sm:$0xff]
        %v494 = vld [vmem:[%s8 + $0x18] sm:$0xff]
        %v495 = vld [vmem:[%s8 + $0x20] sm:$0xff]
        %v496 = vld [vmem:[%s8 + $0x28] sm:$0xff]
        %v497 = vld [vmem:[%s8 + $0x30] sm:$0xff]
        %v498 = vld [vmem:[%s8 + $0x38] sm:$0xff]
        %v499 = vld [vmem:[%s8 + $0x40] sm:$0xff]
        %v500 = vld [vmem:[%s8 + $0x48] sm:$0xff]
        %v501 = vld [vmem:[%s8 + $0x50] sm:$0xff]
        %v502 = vld [vmem:[%s8 + $0x58] sm:$0xff]
        %v503 = vld [vmem:[%s8 + $0x60] sm:$0xff]
        %v504 = vld [vmem:[%s8 + $0x68] sm:$0xff]
        %v505 = vld [vmem:[%s8 + $0x70] sm:$0xff]
        %v506 = vld [vmem:[%s8 + $0x78] sm:$0xff]
        %v507 = vld [vmem:[%s8 + $0x80] sm:$0xff]
        %v508 = vld [vmem:[%s8 + $0x88] sm:$0xff]
        %v509 = vld [vmem:[%s8 + $0x90] sm:$0xff]
        %v510 = vld [vmem:[%s8 + $0x98] sm:$0xff]
        %v511 = vld [vmem:[%s8 + $0xa0] sm:$0xff]
        %v512 = vld [vmem:[%s8 + $0xa8] sm:$0xff]
        %v513 = vld [vmem:[%s8 + $0xb0] sm:$0xff]
        %v514 = vld [vmem:[%s8 + $0xb8] sm:$0xff]
        %v515 = vld [vmem:[%s8 + $0xc0] sm:$0xff]
        %v516 = vld [vmem:[%s8 + $0xc8] sm:$0xff]
        %v517 = vld [vmem:[%s8 + $0xd0] sm:$0xff]
        %v518 = vld [vmem:[%s8 + $0xd8] sm:$0xff]
        %v519 = vld [vmem:[%s8 + $0xe0] sm:$0xff]
        %v520 = vld [vmem:[%s8 + $0xe8] sm:$0xff]
        %v521 = vld [vmem:[%s8 + $0xf0] sm:$0xff]
        %v522 = vld [vmem:[%s8 + $0xf8] sm:$0xff]
        %523 = vmatprep.subr.mxu0 0.0
        %524 = vmatpush1.msra.mxu0 %v491
        %525 = vmatprep.subr.mxu0 0.0
        %526 = vmatpush1.msra.mxu0 %v492
        %527 = vmatprep.subr.mxu0 0.0
        %528 = vmatpush1.msra.mxu0 %v493
        %529 = vmatprep.subr.mxu0 0.0
        %530 = vmatpush1.msra.mxu0 %v494
        %531 = vmatprep.subr.mxu0 0.0
        %532 = vmatpush1.msra.mxu0 %v495
        %533 = vmatprep.subr.mxu0 0.0
        %534 = vmatpush1.msra.mxu0 %v496
        %535 = vmatprep.subr.mxu0 0.0
        %536 = vmatpush1.msra.mxu0 %v497
        %537 = vmatprep.subr.mxu0 0.0
        %538 = vmatpush1.msra.mxu0 %v498
        %539 = vmatprep.subr.mxu0 0.0
        %540 = vmatpush1.msra.mxu0 %v499
        %541 = vmatprep.subr.mxu0 0.0
        %542 = vmatpush1.msra.mxu0 %v500
        %543 = vmatprep.subr.mxu0 0.0
        %544 = vmatpush1.msra.mxu0 %v501
        %545 = vmatprep.subr.mxu0 0.0
        %546 = vmatpush1.msra.mxu0 %v502
        %547 = vmatprep.subr.mxu0 0.0
        %548 = vmatpush1.msra.mxu0 %v503
        %549 = vmatprep.subr.mxu0 0.0
        %550 = vmatpush1.msra.mxu0 %v504
        %551 = vmatprep.subr.mxu0 0.0
        %552 = vmatpush1.msra.mxu0 %v505
        %553 = vmatprep.subr.mxu0 0.0
        %554 = vmatpush1.msra.mxu0 %v506
        %555 = vmatprep.subr.mxu0 0.0
        %556 = vmatpush1.msra.mxu0 %v507
        %557 = vmatprep.subr.mxu0 0.0
        %558 = vmatpush1.msra.mxu0 %v508
        %559 = vmatprep.subr.mxu0 0.0
        %560 = vmatpush1.msra.mxu0 %v509
        %561 = vmatprep.subr.mxu0 0.0
        %562 = vmatpush1.msra.mxu0 %v510
        %563 = vmatprep.subr.mxu0 0.0
        %564 = vmatpush1.msra.mxu0 %v511
        %565 = vmatprep.subr.mxu0 0.0
        %566 = vmatpush1.msra.mxu0 %v512
        %567 = vmatprep.subr.mxu0 0.0
        %568 = vmatpush1.msra.mxu0 %v513
        %569 = vmatprep.subr.mxu0 0.0
        %570 = vmatpush1.msra.mxu0 %v514
        %571 = vmatprep.subr.mxu0 0.0
        %572 = vmatpush1.msra.mxu0 %v515
        %573 = vmatprep.subr.mxu0 0.0
        %574 = vmatpush1.msra.mxu0 %v516
        %575 = vmatprep.subr.mxu0 0.0
        %576 = vmatpush1.msra.mxu0 %v517
        %577 = vmatprep.subr.mxu0 0.0
        %578 = vmatpush1.msra.mxu0 %v518
        %579 = vmatprep.subr.mxu0 0.0
        %580 = vmatpush1.msra.mxu0 %v519
        %581 = vmatprep.subr.mxu0 0.0
        %582 = vmatpush1.msra.mxu0 %v520
        %583 = vmatprep.subr.mxu0 0.0
        %584 = vmatpush1.msra.mxu0 %v521
        %585 = vmatprep.subr.mxu0 0.0
        %586 = vmatpush1.msra.mxu0 %v522
        %587 = vmatprep.mubr.f32.mxu0 %v419
        %588 = vmatmul.mubr.f32.gmra.mrb[0].mxu0 %v385
        %v589 = vpop.f32.mrb[0].mxu0
        %v590 = vadd.f32 0.0, %v589
        %v591 = vpop.f32.mrb[0].mxu0
        %592 = vdwg.mxu0
        %v593 = vld [vmem:[%s2] sm:$0xff]
        %v594 = vld [vmem:[%s1] sm:$0xff]
        %596 = vset.pattern.permute.xlu0 0
        %597 = vperm.xlu0 %596, %v593
        %v598 = vpop.permute.xlu0 %597
        %vm600 = vcmask 31744
        %v602 = vsel %vm600, %v594, 0
        %vm604 = vcmask 1043456
        %v606 = vsel %vm604, %v488, 0
        %608 = vmatprep.subr.mxu0 0.0
        %609 = vmatpush1.msra.mxu0 %v606
        %610 = vmatprep.subr.mxu0 0.0
        %611 = vmatpush1.msra.mxu0 0.0
        %612 = vmatprep.subr.mxu0 0.0
        %613 = vmatpush1.msra.mxu0 0.0
        %614 = vmatprep.subr.mxu0 0.0
        %615 = vmatpush1.msra.mxu0 0.0
        %616 = vmatprep.subr.mxu0 0.0
        %617 = vmatpush1.msra.mxu0 0.0
        %618 = vmatprep.subr.mxu0 0.0
        %619 = vmatpush1.msra.mxu0 0.0
        %620 = vmatprep.subr.mxu0 0.0
        %621 = vmatpush1.msra.mxu0 0.0
        %622 = vmatprep.subr.mxu0 0.0
        %623 = vmatpush1.msra.mxu0 0.0
        %624 = vmatprep.subr.mxu0 0.0
        %625 = vmatpush1.msra.mxu0 0.0
        %626 = vmatprep.subr.mxu0 0.0
        %627 = vmatpush1.msra.mxu0 0.0
        %628 = vmatprep.subr.mxu0 0.0
        %629 = vmatpush1.msra.mxu0 0.0
        %630 = vmatprep.subr.mxu0 0.0
        %631 = vmatpush1.msra.mxu0 0.0
        %632 = vmatprep.subr.mxu0 0.0
        %633 = vmatpush1.msra.mxu0 0.0
        %634 = vmatprep.subr.mxu0 0.0
        %635 = vmatpush1.msra.mxu0 0.0
        %636 = vmatprep.subr.mxu0 0.0
        %637 = vmatpush1.msra.mxu0 0.0
        %638 = vmatprep.subr.mxu0 0.0
        %639 = vmatpush1.msra.mxu0 0.0
        %640 = vmatprep.subr.mxu0 0.0
        %641 = vmatpush1.msra.mxu0 0.0
        %642 = vmatprep.subr.mxu0 0.0
        %643 = vmatpush1.msra.mxu0 0.0
        %644 = vmatprep.subr.mxu0 0.0
        %645 = vmatpush1.msra.mxu0 0.0
        %646 = vmatprep.subr.mxu0 0.0
        %647 = vmatpush1.msra.mxu0 0.0
        %648 = vmatprep.subr.mxu0 0.0
        %649 = vmatpush1.msra.mxu0 0.0
        %650 = vmatprep.subr.mxu0 0.0
        %651 = vmatpush1.msra.mxu0 0.0
        %652 = vmatprep.subr.mxu0 0.0
        %653 = vmatpush1.msra.mxu0 0.0
        %654 = vmatprep.subr.mxu0 0.0
        %655 = vmatpush1.msra.mxu0 0.0
        %656 = vmatprep.subr.mxu0 0.0
        %657 = vmatpush1.msra.mxu0 0.0
        %658 = vmatprep.subr.mxu0 0.0
        %659 = vmatpush1.msra.mxu0 0.0
        %660 = vmatprep.subr.mxu0 0.0
        %661 = vmatpush1.msra.mxu0 0.0
        %662 = vmatprep.subr.mxu0 0.0
        %663 = vmatpush1.msra.mxu0 0.0
        %664 = vmatprep.subr.mxu0 0.0
        %665 = vmatpush1.msra.mxu0 0.0
        %666 = vmatprep.subr.mxu0 0.0
        %667 = vmatpush1.msra.mxu0 0.0
        %668 = vmatprep.subr.mxu0 0.0
        %669 = vmatpush1.msra.mxu0 0.0
        %670 = vmatprep.subr.mxu0 0.0
        %671 = vmatpush1.msra.mxu0 0.0
        %672 = vmatprep.mubr.f32.mxu0 0.0
        %673 = vmatmul.mubr.f32.gmra.mrb[0].mxu0 %v602
        %v674 = vpop.f32.mrb[0].mxu0
        %v675 = vadd.f32 %v598, %v674
        %v676 = vpop.f32.mrb[0].mxu0
        %677 = vdwg.mxu0
        %v679 = vsel %vm604, %v590, 0
        %681 = vmatprep.subr.mxu0 0.0
        %682 = vmatpush1.msra.mxu0 %v679
        %683 = vmatprep.subr.mxu0 0.0
        %684 = vmatpush1.msra.mxu0 0.0
        %685 = vmatprep.subr.mxu0 0.0
        %686 = vmatpush1.msra.mxu0 0.0
        %687 = vmatprep.subr.mxu0 0.0
        %688 = vmatpush1.msra.mxu0 0.0
        %689 = vmatprep.subr.mxu0 0.0
        %690 = vmatpush1.msra.mxu0 0.0
        %691 = vmatprep.subr.mxu0 0.0
        %692 = vmatpush1.msra.mxu0 0.0
        %693 = vmatprep.subr.mxu0 0.0
        %694 = vmatpush1.msra.mxu0 0.0
        %695 = vmatprep.subr.mxu0 0.0
        %696 = vmatpush1.msra.mxu0 0.0
        %697 = vmatprep.subr.mxu0 0.0
        %698 = vmatpush1.msra.mxu0 0.0
        %699 = vmatprep.subr.mxu0 0.0
        %700 = vmatpush1.msra.mxu0 0.0
        %701 = vmatprep.subr.mxu0 0.0
        %702 = vmatpush1.msra.mxu0 0.0
        %703 = vmatprep.subr.mxu0 0.0
        %704 = vmatpush1.msra.mxu0 0.0
        %705 = vmatprep.subr.mxu0 0.0
        %706 = vmatpush1.msra.mxu0 0.0
        %707 = vmatprep.subr.mxu0 0.0
        %708 = vmatpush1.msra.mxu0 0.0
        %709 = vmatprep.subr.mxu0 0.0
        %710 = vmatpush1.msra.mxu0 0.0
        %711 = vmatprep.subr.mxu0 0.0
        %712 = vmatpush1.msra.mxu0 0.0
        %713 = vmatprep.subr.mxu0 0.0
        %714 = vmatpush1.msra.mxu0 0.0
        %715 = vmatprep.subr.mxu0 0.0
        %716 = vmatpush1.msra.mxu0 0.0
        %717 = vmatprep.subr.mxu0 0.0
        %718 = vmatpush1.msra.mxu0 0.0
        %719 = vmatprep.subr.mxu0 0.0
        %720 = vmatpush1.msra.mxu0 0.0
        %721 = vmatprep.subr.mxu0 0.0
        %722 = vmatpush1.msra.mxu0 0.0
        %723 = vmatprep.subr.mxu0 0.0
        %724 = vmatpush1.msra.mxu0 0.0
        %725 = vmatprep.subr.mxu0 0.0
        %726 = vmatpush1.msra.mxu0 0.0
        %727 = vmatprep.subr.mxu0 0.0
        %728 = vmatpush1.msra.mxu0 0.0
        %729 = vmatprep.subr.mxu0 0.0
        %730 = vmatpush1.msra.mxu0 0.0
        %731 = vmatprep.subr.mxu0 0.0
        %732 = vmatpush1.msra.mxu0 0.0
        %733 = vmatprep.subr.mxu0 0.0
        %734 = vmatpush1.msra.mxu0 0.0
        %735 = vmatprep.subr.mxu0 0.0
        %736 = vmatpush1.msra.mxu0 0.0
        %737 = vmatprep.subr.mxu0 0.0
        %738 = vmatpush1.msra.mxu0 0.0
        %739 = vmatprep.subr.mxu0 0.0
        %740 = vmatpush1.msra.mxu0 0.0
        %741 = vmatprep.subr.mxu0 0.0
        %742 = vmatpush1.msra.mxu0 0.0
        %743 = vmatprep.subr.mxu0 0.0
        %744 = vmatpush1.msra.mxu0 0.0
        %745 = vmatprep.mubr.f32.mxu0 0.0
        %746 = vmatmul.mubr.f32.gmra.mrb[0].mxu0 %v602
        %v747 = vpop.f32.mrb[0].mxu0
        %v748 = vadd.f32 %v598, %v747
        %v749 = vpop.f32.mrb[0].mxu0
        %750 = vdwg.mxu0
        %v751 = vadd.f32 %v675, 3.0
        %v752 = vmax.f32 %v751, 0.0
        %v753 = vmin.f32 %v752, 6.0
        %v754 = vmul.f32 %v753, 0.16666667
        %v755 = vmul.f32 %v675, %v754
        %v756 = vadd.f32 %v748, 3.0
        %v757 = vmax.f32 %v756, 0.0
        %v758 = vmin.f32 %v757, 6.0
        %v759 = vmul.f32 %v758, 0.16666667
        %v760 = vmul.f32 %v748, %v759
        %v761 = vld [vmem:[%s3] sm:$0xf]
        %v762 = vld [vmem:[%s4] sm:$0xf]
        %764 = vset.pattern.permute.xlu0 0
        %765 = vperm.xlu0 %764, %v762
        %v766 = vpop.permute.xlu0 %765
        %vm768 = vcmask 64512
        %v770 = vsel %vm768, %v761, 0
        %772 = vmatprep.subr.mxu0 0.0
        %773 = vmatpush1.msra.mxu0 %v755
        %774 = vmatprep.subr.mxu0 0.0
        %775 = vmatpush1.msra.mxu0 0.0
        %776 = vmatprep.subr.mxu0 0.0
        %777 = vmatpush1.msra.mxu0 0.0
        %778 = vmatprep.subr.mxu0 0.0
        %779 = vmatpush1.msra.mxu0 0.0
        %780 = vmatprep.subr.mxu0 0.0
        %781 = vmatpush1.msra.mxu0 0.0
        %782 = vmatprep.subr.mxu0 0.0
        %783 = vmatpush1.msra.mxu0 0.0
        %784 = vmatprep.subr.mxu0 0.0
        %785 = vmatpush1.msra.mxu0 0.0
        %786 = vmatprep.subr.mxu0 0.0
        %787 = vmatpush1.msra.mxu0 0.0
        %788 = vmatprep.subr.mxu0 0.0
        %789 = vmatpush1.msra.mxu0 0.0
        %790 = vmatprep.subr.mxu0 0.0
        %791 = vmatpush1.msra.mxu0 0.0
        %792 = vmatprep.subr.mxu0 0.0
        %793 = vmatpush1.msra.mxu0 0.0
        %794 = vmatprep.subr.mxu0 0.0
        %795 = vmatpush1.msra.mxu0 0.0
        %796 = vmatprep.subr.mxu0 0.0
        %797 = vmatpush1.msra.mxu0 0.0
        %798 = vmatprep.subr.mxu0 0.0
        %799 = vmatpush1.msra.mxu0 0.0
        %800 = vmatprep.subr.mxu0 0.0
        %801 = vmatpush1.msra.mxu0 0.0
        %802 = vmatprep.subr.mxu0 0.0
        %803 = vmatpush1.msra.mxu0 0.0
        %804 = vmatprep.subr.mxu0 0.0
        %805 = vmatpush1.msra.mxu0 0.0
        %806 = vmatprep.subr.mxu0 0.0
        %807 = vmatpush1.msra.mxu0 0.0
        %808 = vmatprep.subr.mxu0 0.0
        %809 = vmatpush1.msra.mxu0 0.0
        %810 = vmatprep.subr.mxu0 0.0
        %811 = vmatpush1.msra.mxu0 0.0
        %812 = vmatprep.subr.mxu0 0.0
        %813 = vmatpush1.msra.mxu0 0.0
        %814 = vmatprep.subr.mxu0 0.0
        %815 = vmatpush1.msra.mxu0 0.0
        %816 = vmatprep.subr.mxu0 0.0
        %817 = vmatpush1.msra.mxu0 0.0
        %818 = vmatprep.subr.mxu0 0.0
        %819 = vmatpush1.msra.mxu0 0.0
        %820 = vmatprep.subr.mxu0 0.0
        %821 = vmatpush1.msra.mxu0 0.0
        %822 = vmatprep.subr.mxu0 0.0
        %823 = vmatpush1.msra.mxu0 0.0
        %824 = vmatprep.subr.mxu0 0.0
        %825 = vmatpush1.msra.mxu0 0.0
        %826 = vmatprep.subr.mxu0 0.0
        %827 = vmatpush1.msra.mxu0 0.0
        %828 = vmatprep.subr.mxu0 0.0
        %829 = vmatpush1.msra.mxu0 0.0
        %830 = vmatprep.subr.mxu0 0.0
        %831 = vmatpush1.msra.mxu0 0.0
        %832 = vmatprep.subr.mxu0 0.0
        %833 = vmatpush1.msra.mxu0 0.0
        %834 = vmatprep.subr.mxu0 0.0
        %835 = vmatpush1.msra.mxu0 0.0
        %836 = vmatprep.mubr.f32.mxu0 0.0
        %837 = vmatmul.mubr.f32.gmra.mrb[0].mxu0 %v770
        %v838 = vpop.f32.mrb[0].mxu0
        %v839 = vadd.f32 %v766, %v838
        %v840 = vpop.f32.mrb[0].mxu0
        %841 = vdwg.mxu0
        %v842 = vsub.f32 0.0, %v839
        %v843 = vmul.f32 %v842, 1.442695
        %v844 = vpow.pop %v843
        %v845 = vadd.f32 %v844, 1.0
        %v846 = vrcp.pop %v845
        %v847 = vmul.f32 1.0, %v846
        %v848 = vld [vmem:[%s5] sm:$0xf]
        %v849 = vld [vmem:[%s6] sm:$0xf]
        %851 = vset.pattern.permute.xlu0 0
        %852 = vperm.xlu0 %851, %v849
        %v853 = vpop.permute.xlu0 %852
        %v856 = vsel %vm768, %v848, 0
        %858 = vmatprep.subr.mxu0 0.0
        %859 = vmatpush1.msra.mxu0 %v760
        %860 = vmatprep.subr.mxu0 0.0
        %861 = vmatpush1.msra.mxu0 0.0
        %862 = vmatprep.subr.mxu0 0.0
        %863 = vmatpush1.msra.mxu0 0.0
        %864 = vmatprep.subr.mxu0 0.0
        %865 = vmatpush1.msra.mxu0 0.0
        %866 = vmatprep.subr.mxu0 0.0
        %867 = vmatpush1.msra.mxu0 0.0
        %868 = vmatprep.subr.mxu0 0.0
        %869 = vmatpush1.msra.mxu0 0.0
        %870 = vmatprep.subr.mxu0 0.0
        %871 = vmatpush1.msra.mxu0 0.0
        %872 = vmatprep.subr.mxu0 0.0
        %873 = vmatpush1.msra.mxu0 0.0
        %874 = vmatprep.subr.mxu0 0.0
        %875 = vmatpush1.msra.mxu0 0.0
        %876 = vmatprep.subr.mxu0 0.0
        %877 = vmatpush1.msra.mxu0 0.0
        %878 = vmatprep.subr.mxu0 0.0
        %879 = vmatpush1.msra.mxu0 0.0
        %880 = vmatprep.subr.mxu0 0.0
        %881 = vmatpush1.msra.mxu0 0.0
        %882 = vmatprep.subr.mxu0 0.0
        %883 = vmatpush1.msra.mxu0 0.0
        %884 = vmatprep.subr.mxu0 0.0
        %885 = vmatpush1.msra.mxu0 0.0
        %886 = vmatprep.subr.mxu0 0.0
        %887 = vmatpush1.msra.mxu0 0.0
        %888 = vmatprep.subr.mxu0 0.0
        %889 = vmatpush1.msra.mxu0 0.0
        %890 = vmatprep.subr.mxu0 0.0
        %891 = vmatpush1.msra.mxu0 0.0
        %892 = vmatprep.subr.mxu0 0.0
        %893 = vmatpush1.msra.mxu0 0.0
        %894 = vmatprep.subr.mxu0 0.0
        %895 = vmatpush1.msra.mxu0 0.0
        %896 = vmatprep.subr.mxu0 0.0
        %897 = vmatpush1.msra.mxu0 0.0
        %898 = vmatprep.subr.mxu0 0.0
        %899 = vmatpush1.msra.mxu0 0.0
        %900 = vmatprep.subr.mxu0 0.0
        %901 = vmatpush1.msra.mxu0 0.0
        %902 = vmatprep.subr.mxu0 0.0
        %903 = vmatpush1.msra.mxu0 0.0
        %904 = vmatprep.subr.mxu0 0.0
        %905 = vmatpush1.msra.mxu0 0.0
        %906 = vmatprep.subr.mxu0 0.0
        %907 = vmatpush1.msra.mxu0 0.0
        %908 = vmatprep.subr.mxu0 0.0
        %909 = vmatpush1.msra.mxu0 0.0
        %910 = vmatprep.subr.mxu0 0.0
        %911 = vmatpush1.msra.mxu0 0.0
        %912 = vmatprep.subr.mxu0 0.0
        %913 = vmatpush1.msra.mxu0 0.0
        %914 = vmatprep.subr.mxu0 0.0
        %915 = vmatpush1.msra.mxu0 0.0
        %916 = vmatprep.subr.mxu0 0.0
        %917 = vmatpush1.msra.mxu0 0.0
        %918 = vmatprep.subr.mxu0 0.0
        %919 = vmatpush1.msra.mxu0 0.0
        %920 = vmatprep.subr.mxu0 0.0
        %921 = vmatpush1.msra.mxu0 0.0
        %922 = vmatprep.mubr.f32.mxu0 0.0
        %923 = vmatmul.mubr.f32.gmra.mrb[0].mxu0 %v856
        %v924 = vpop.f32.mrb[0].mxu0
        %v925 = vadd.f32 %v853, %v924
        %v926 = vpop.f32.mrb[0].mxu0
        %927 = vdwg.mxu0
        %v928 = vsub.f32 0.0, %v925
        %v929 = vmul.f32 %v928, 1.442695
        %v930 = vpow.pop %v929
        %v931 = vadd.f32 %v930, 1.0
        %v932 = vrcp.pop %v931
        %v933 = vmul.f32 1.0, %v932
        %v934 = vld [vmem:[%s9] sm:$0xff]
        %v935 = vld [vmem:[%s9 + $0x8] sm:$0xff]
        %v936 = vld [vmem:[%s9 + $0x10] sm:$0xff]
        %v937 = vld [vmem:[%s9 + $0x18] sm:$0xff]
        %vm938 = vcmask 130048
        %v940 = vsel %vm938, %v847, 0
        %942 = vmatprep.subr.mxu0 %v935
        %943 = vmatpush1.msra.mxu0 %v934
        %944 = vmatprep.subr.mxu0 %v937
        %945 = vmatpush1.msra.mxu0 %v936
        %946 = vmatprep.subr.mxu0 0.0
        %947 = vmatpush1.msra.mxu0 0.0
        %948 = vmatprep.subr.mxu0 0.0
        %949 = vmatpush1.msra.mxu0 0.0
        %950 = vmatprep.subr.mxu0 0.0
        %951 = vmatpush1.msra.mxu0 0.0
        %952 = vmatprep.subr.mxu0 0.0
        %953 = vmatpush1.msra.mxu0 0.0
        %954 = vmatprep.subr.mxu0 0.0
        %955 = vmatpush1.msra.mxu0 0.0
        %956 = vmatprep.subr.mxu0 0.0
        %957 = vmatpush1.msra.mxu0 0.0
        %958 = vmatprep.subr.mxu0 0.0
        %959 = vmatpush1.msra.mxu0 0.0
        %960 = vmatprep.subr.mxu0 0.0
        %961 = vmatpush1.msra.mxu0 0.0
        %962 = vmatprep.subr.mxu0 0.0
        %963 = vmatpush1.msra.mxu0 0.0
        %964 = vmatprep.subr.mxu0 0.0
        %965 = vmatpush1.msra.mxu0 0.0
        %966 = vmatprep.subr.mxu0 0.0
        %967 = vmatpush1.msra.mxu0 0.0
        %968 = vmatprep.subr.mxu0 0.0
        %969 = vmatpush1.msra.mxu0 0.0
        %970 = vmatprep.subr.mxu0 0.0
        %971 = vmatpush1.msra.mxu0 0.0
        %972 = vmatprep.subr.mxu0 0.0
        %973 = vmatpush1.msra.mxu0 0.0
        %974 = vmatprep.subr.mxu0 0.0
        %975 = vmatpush1.msra.mxu0 0.0
        %976 = vmatprep.subr.mxu0 0.0
        %977 = vmatpush1.msra.mxu0 0.0
        %978 = vmatprep.subr.mxu0 0.0
        %979 = vmatpush1.msra.mxu0 0.0
        %980 = vmatprep.subr.mxu0 0.0
        %981 = vmatpush1.msra.mxu0 0.0
        %982 = vmatprep.subr.mxu0 0.0
        %983 = vmatpush1.msra.mxu0 0.0
        %984 = vmatprep.subr.mxu0 0.0
        %985 = vmatpush1.msra.mxu0 0.0
        %986 = vmatprep.subr.mxu0 0.0
        %987 = vmatpush1.msra.mxu0 0.0
        %988 = vmatprep.subr.mxu0 0.0
        %989 = vmatpush1.msra.mxu0 0.0
        %990 = vmatprep.subr.mxu0 0.0
        %991 = vmatpush1.msra.mxu0 0.0
        %992 = vmatprep.subr.mxu0 0.0
        %993 = vmatpush1.msra.mxu0 0.0
        %994 = vmatprep.subr.mxu0 0.0
        %995 = vmatpush1.msra.mxu0 0.0
        %996 = vmatprep.subr.mxu0 0.0
        %997 = vmatpush1.msra.mxu0 0.0
        %998 = vmatprep.subr.mxu0 0.0
        %999 = vmatpush1.msra.mxu0 0.0
        %1000 = vmatprep.subr.mxu0 0.0
        %1001 = vmatpush1.msra.mxu0 0.0
        %1002 = vmatprep.subr.mxu0 0.0
        %1003 = vmatpush1.msra.mxu0 0.0
        %1004 = vmatprep.subr.mxu0 0.0
        %1005 = vmatpush1.msra.mxu0 0.0
        %1006 = vmatprep.mubr.f32.mxu0 0.0
        %1007 = vmatmul.mubr.f32.gmra.mrb[0].mxu0 %v940
        %v1008 = vpop.f32.mrb[0].mxu0
        %v1009 = vadd.f32 0.0, %v1008
        %v1010 = vpop.f32.mrb[0].mxu0
        %v1011 = vadd.f32 0.0, %v1010
        %1012 = vdwg.mxu0
        %v1013 = vld [vmem:[%s10] sm:$0xff]
        %v1014 = vld [vmem:[%s10 + $0x8] sm:$0xff]
        %v1015 = vld [vmem:[%s10 + $0x10] sm:$0xff]
        %v1016 = vld [vmem:[%s10 + $0x18] sm:$0xff]
        %v1018 = vsel %vm938, %v933, 0
        %1020 = vmatprep.subr.mxu0 %v1014
        %1021 = vmatpush1.msra.mxu0 %v1013
        %1022 = vmatprep.subr.mxu0 %v1016
        %1023 = vmatpush1.msra.mxu0 %v1015
        %1024 = vmatprep.subr.mxu0 0.0
        %1025 = vmatpush1.msra.mxu0 0.0
        %1026 = vmatprep.subr.mxu0 0.0
        %1027 = vmatpush1.msra.mxu0 0.0
        %1028 = vmatprep.subr.mxu0 0.0
        %1029 = vmatpush1.msra.mxu0 0.0
        %1030 = vmatprep.subr.mxu0 0.0
        %1031 = vmatpush1.msra.mxu0 0.0
        %1032 = vmatprep.subr.mxu0 0.0
        %1033 = vmatpush1.msra.mxu0 0.0
        %1034 = vmatprep.subr.mxu0 0.0
        %1035 = vmatpush1.msra.mxu0 0.0
        %1036 = vmatprep.subr.mxu0 0.0
        %1037 = vmatpush1.msra.mxu0 0.0
        %1038 = vmatprep.subr.mxu0 0.0
        %1039 = vmatpush1.msra.mxu0 0.0
        %1040 = vmatprep.subr.mxu0 0.0
        %1041 = vmatpush1.msra.mxu0 0.0
        %1042 = vmatprep.subr.mxu0 0.0
        %1043 = vmatpush1.msra.mxu0 0.0
        %1044 = vmatprep.subr.mxu0 0.0
        %1045 = vmatpush1.msra.mxu0 0.0
        %1046 = vmatprep.subr.mxu0 0.0
        %1047 = vmatpush1.msra.mxu0 0.0
        %1048 = vmatprep.subr.mxu0 0.0
        %1049 = vmatpush1.msra.mxu0 0.0
        %1050 = vmatprep.subr.mxu0 0.0
        %1051 = vmatpush1.msra.mxu0 0.0
        %1052 = vmatprep.subr.mxu0 0.0
        %1053 = vmatpush1.msra.mxu0 0.0
        %1054 = vmatprep.subr.mxu0 0.0
        %1055 = vmatpush1.msra.mxu0 0.0
        %1056 = vmatprep.subr.mxu0 0.0
        %1057 = vmatpush1.msra.mxu0 0.0
        %1058 = vmatprep.subr.mxu0 0.0
        %1059 = vmatpush1.msra.mxu0 0.0
        %1060 = vmatprep.subr.mxu0 0.0
        %1061 = vmatpush1.msra.mxu0 0.0
        %1062 = vmatprep.subr.mxu0 0.0
        %1063 = vmatpush1.msra.mxu0 0.0
        %1064 = vmatprep.subr.mxu0 0.0
        %1065 = vmatpush1.msra.mxu0 0.0
        %1066 = vmatprep.subr.mxu0 0.0
        %1067 = vmatpush1.msra.mxu0 0.0
        %1068 = vmatprep.subr.mxu0 0.0
        %1069 = vmatpush1.msra.mxu0 0.0
        %1070 = vmatprep.subr.mxu0 0.0
        %1071 = vmatpush1.msra.mxu0 0.0
        %1072 = vmatprep.subr.mxu0 0.0
        %1073 = vmatpush1.msra.mxu0 0.0
        %1074 = vmatprep.subr.mxu0 0.0
        %1075 = vmatpush1.msra.mxu0 0.0
        %1076 = vmatprep.subr.mxu0 0.0
        %1077 = vmatpush1.msra.mxu0 0.0
        %1078 = vmatprep.subr.mxu0 0.0
        %1079 = vmatpush1.msra.mxu0 0.0
        %1080 = vmatprep.subr.mxu0 0.0
        %1081 = vmatpush1.msra.mxu0 0.0
        %1082 = vmatprep.subr.mxu0 0.0
        %1083 = vmatpush1.msra.mxu0 0.0
        %1084 = vmatprep.mubr.f32.mxu0 0.0
        %1085 = vmatmul.mubr.f32.gmra.mrb[0].mxu0 %v1018
        %v1086 = vpop.f32.mrb[0].mxu0
        %v1087 = vadd.f32 0.0, %v1086
        %v1088 = vpop.f32.mrb[0].mxu0
        %v1089 = vadd.f32 0.0, %v1088
        %1090 = vdwg.mxu0
        %v1091 = vmul.f32 %v1009, %v1087
        %v1092 = vmul.f32 %v1011, %v1089
        %v1093 = vadd.f32 %v1091, 1.0
        %v1094 = vadd.f32 %v1092, 1.0
        %v1097 = vcombine.low %v1093, %v1094
        %v1099 = vmul.f32 %v385, %v1097
        %1100 = vst [vmem:[%s379] sm:$0xff] %v1099
        %s1101 = sand.u32 %s269, 1
        %s1102 = scalar_lea.sflag [#allocation3], %s1101
        %s1103 = sand.u32 %s269, 1
        %s1104 = smul.addr %s1103, 8
        %s1105 = scalar_lea.vmem [#allocation2], %s1104
        // Predicated region
        $region65: #{tpu_custom_call.1} parent=63 // pred_check
          %p1106 = pneg %p279
        $region66: #{tpu_custom_call.1} parent=63 // pred_check_branch
          %1108 = sbr.rel (%p1106) target = $region68
        $region67: #{tpu_custom_call.1} parent=63 // pred_region
          %s1110 = ssub.s32 128, 128
          %1111 = vsyncadd %s1102, %s1110
          %s1112 = smul.addr %s25, 2
          %s1113 = smul.addr %s1112, 64
          %s1114 = scalar_lea.hbm %s11, %s1113
          %s1116 = sshll.u32 %s1105, 4
          %s1117 = int_to_ptr.vmem [resolvable:$true] %s1116
          %1119 = dma.vmem_to_hbm [thread:$0]  %s1117, 128, %s1114, %s1102
        $region68: #{tpu_custom_call.1} parent=63 // pred_fallthru
          _
      $region64: #{tpu_custom_call.1} parent=5 // pred_fallthru
        _
      %p1120 = scmp.le.s32.totalorder 2, %s20
      // Predicated region
      $region69: #{tpu_custom_call.1} parent=5 // pred_check
        %p1121 = pneg %p1120
      $region70: #{tpu_custom_call.1} parent=5 // pred_check_branch
        %1123 = sbr.rel (%p1121) target = $region72
      $region71: #{tpu_custom_call.1} parent=5 // pred_region
        %s1124 = ssub.s32 %s20, 2
        // Predicated region
        $region73: #{tpu_custom_call.1} parent=71 // pred_check
          %p1125 = pneg %p285
        $region74: #{tpu_custom_call.1} parent=71 // pred_check_branch
          %1127 = sbr.rel (%p1125) target = $region76
        $region75: #{tpu_custom_call.1} parent=71 // pred_region
          %s1128 = sand.u32 %s270, 1
          %s1129 = scalar_lea.sflag [#allocation3], %s1128
          %s1130 = sand.u32 %s270, 1
          %s1131 = smul.addr %s1130, 8
          %s1132 = scalar_lea.vmem [#allocation2], %s1131
          %1133 = dma.done %s1129, 128
        $region76: #{tpu_custom_call.1} parent=71 // pred_fallthru
          _
      $region72: #{tpu_custom_call.1} parent=5 // pred_fallthru
        _
    $region6: #{tpu_custom_call.1} parent=1 // loop_footer
      %s24 = sadd.s32 1, %s20
    $region7: #{tpu_custom_call.1} parent=1 // loop_footer_branch
      %19 = sbr.rel target = $region3
    $region8: #{tpu_custom_call.1} parent=1 // loop_exit
      _
    %1134 = vsyncpa [#allocation3], 1
    %s1135 = scalar_lea.sflag [#allocation3], 1
    %1136 = vsyncpa %s1135, 1

</llo_original>
